<compile_context>
chip_gen: v5e
topology: v5e:2x2
jax: 0.10.0
libtpu: 0.0.40
codegen_flags: <defaults>
</compile_context>

<pallas_src>
import jax
import jax.numpy as jnp
from jax.experimental import pallas as pl
from jax.experimental.pallas import tpu as pltpu


def _round_up(x, m):
    return ((x + m - 1) // m) * m


def _discriminator_kernel(imp_ref, hint_ref,
                          w1a_ref, w1b_ref, b1_ref,
                          w2_ref, b2_ref,
                          w3_ref, b3_ref,
                          o_ref):
    """One batch tile of the 3-layer MLP (concat fused into two dots)."""
    imp = imp_ref[...].astype(jnp.bfloat16)    # (TB, D)
    hint = hint_ref[...].astype(jnp.bfloat16)  # (TB, D)

    # Layer 1: x @ W1 == imp @ W1[:D] + hint @ W1[D:]  (concat fused away)
    h1 = (jnp.dot(imp, w1a_ref[...], preferred_element_type=jnp.float32)
          + jnp.dot(hint, w1b_ref[...], preferred_element_type=jnp.float32)
          + b1_ref[...])
    h1 = jnp.maximum(h1, 0.0).astype(jnp.bfloat16)

    # Layer 2
    h2 = jnp.dot(h1, w2_ref[...], preferred_element_type=jnp.float32) + b2_ref[...]
    h2 = jnp.maximum(h2, 0.0).astype(jnp.bfloat16)

    # Output layer + sigmoid (sigmoid in f32, stored as bf16)
    logits = jnp.dot(h2, w3_ref[...], preferred_element_type=jnp.float32) + b3_ref[...]
    o_ref[...] = jax.nn.sigmoid(logits).astype(o_ref.dtype)


def prepare_params(params):
    """One-time weight preparation (cast to bf16, pad hidden dim to 128 lanes).

    Weights are static across forward calls, so doing this per call would add
    extra XLA ops and HBM traffic to an already bandwidth-bound op.
    Zero padding keeps numerics unchanged through matmul / bias / ReLU.
    """
    w1, b1, w2, b2, w3, b3 = params
    two_d, H = w1.shape
    D = two_d // 2
    assert w2.shape == (H, H) and w3.shape == (H, D)
    LANE = 128
    Hp = _round_up(H, LANE)

    def pad2(a, r, c):
        return jnp.pad(a, ((0, r - a.shape[0]), (0, c - a.shape[1])))

    w1a = pad2(w1[:D], D, Hp).astype(jnp.bfloat16)                         # (D, Hp)
    w1b = pad2(w1[D:], D, Hp).astype(jnp.bfloat16)                         # (D, Hp)
    b1p = pad2(jnp.asarray(b1, jnp.float32).reshape(1, -1), 1, Hp)         # (1, Hp)
    w2p = pad2(w2, Hp, Hp).astype(jnp.bfloat16)                            # (Hp, Hp)
    b2p = pad2(jnp.asarray(b2, jnp.float32).reshape(1, -1), 1, Hp)         # (1, Hp)
    w3p = pad2(w3, Hp, D).astype(jnp.bfloat16)                             # (Hp, D)
    b3p = jnp.asarray(b3, jnp.float32).reshape(1, D)                       # (1, D)
    return (w1a, w1b, b1p, w2p, b2p, w3p, b3p)


def discriminator_forward(imputed_data, hint_matrix, prepared_params, *,
                          block_b=2048, out_dtype=jnp.float32):
    """GAIN discriminator forward using pre-prepared (padded bf16) weights."""
    w1a, w1b, b1p, w2p, b2p, w3p, b3p = prepared_params
    B, D = imputed_data.shape
    Hp = w1a.shape[1]
    assert hint_matrix.shape == (B, D)
    assert w1a.shape == (D, Hp) and w3p.shape == (Hp, D)

    SUB = 8
    block_b = _round_up(max(block_b, SUB), SUB)
    # Cap the tile at ~ceil(B/2) so the batch grid has >=2 tiles whenever the
    # batch allows it -> the "parallel" axis can shard across both v7x TCs.
    two_way = _round_up(pl.cdiv(B, 2), SUB)
    TB = max(SUB, min(block_b, two_way))
    Bp = _round_up(B, TB)
    grid = (Bp // TB,)

    imp, hint = imputed_data, hint_matrix
    if Bp != B:
        # Only the batch dim is padded (so the grid divides evenly); padded
        # rows just compute sigmoid of the bias path and are sliced off below.
        imp = jnp.pad(imp, ((0, Bp - B), (0, 0)))
        hint = jnp.pad(hint, ((0, Bp - B), (0, 0)))

    act_spec = pl.BlockSpec((TB, D), lambda i: (i, 0))          # batch-tiled
    const_spec = lambda shape: pl.BlockSpec(shape, lambda i: (0, 0))  # resident

    # VMEM budget from actual buffer sizes: double-buffered input/output tiles,
    # resident weights (2 buffers each by default), plus room for the f32
    # intermediate activations the kernel body needs. Floor 16 MiB, cap 64 MiB.
    in_item = imp.dtype.itemsize
    act_bytes = 2 * 2 * TB * D * in_item                  # imp + hint tiles, x2 buffers
    out_bytes = 2 * TB * D * 2                            # bf16 out tile, x2 buffers
    w_bytes = sum(2 * a.size * a.dtype.itemsize for a in prepared_params)
    interm_bytes = 6 * TB * Hp * 4                        # h1/h2/acc temporaries (f32)
    vmem_limit = int(min(64 << 20,
                         max(16 << 20,
                             2 * (act_bytes + out_bytes + w_bytes + interm_bytes)
                             + (4 << 20))))

    out_p = pl.pallas_call(
        _discriminator_kernel,
        out_shape=jax.ShapeDtypeStruct((Bp, D), jnp.bfloat16),
        grid=grid,
        in_specs=[
            act_spec,                 # imputed tile  (TB, D)
            act_spec,                 # hint tile     (TB, D)
            const_spec((D, Hp)),      # W1a
            const_spec((D, Hp)),      # W1b
            const_spec((1, Hp)),      # b1
            const_spec((Hp, Hp)),     # W2
            const_spec((1, Hp)),      # b2
            const_spec((Hp, D)),      # W3
            const_spec((1, D)),       # b3
        ],
        out_specs=act_spec,
        compiler_params=pltpu.CompilerParams(
            dimension_semantics=("parallel",),   # shard batch tiles across v7x TCs
            vmem_limit_bytes=vmem_limit,
        ),
    )(imp, hint, w1a, w1b, b1p, w2p, b2p, w3p, b3p)

    out = out_p[:B]
    return out.astype(out_dtype)


def init_params(key, input_dim, hidden_dim):
    """Deterministic init mimicking torch.nn.Linear default (U[+/-1/sqrt(fan_in)])."""
    ks = jax.random.split(key, 6)

    def linear(kw, kb, fan_in, fan_out):
        bound = 1.0 / jnp.sqrt(fan_in)
        w = jax.random.uniform(kw, (fan_in, fan_out), jnp.float32, -bound, bound)
        b = jax.random.uniform(kb, (1, fan_out), jnp.float32, -bound, bound)
        return w, b

    w1, b1 = linear(ks[0], ks[1], 2 * input_dim, hidden_dim)
    w2, b2 = linear(ks[2], ks[3], hidden_dim, hidden_dim)
    w3, b3 = linear(ks[4], ks[5], hidden_dim, input_dim)
    return (w1, b1, w2, b2, w3, b3)


def reference_forward_f32(imputed_data, hint_matrix, params):
    """Pure-f32 JAX reference (matches the PyTorch module numerics)."""
    w1, b1, w2, b2, w3, b3 = params
    x = jnp.concatenate([imputed_data, hint_matrix], axis=1).astype(jnp.float32)
    h1 = jnp.maximum(x @ w1 + b1, 0.0)
    h2 = jnp.maximum(h1 @ w2 + b2, 0.0)
    return jax.nn.sigmoid(h2 @ w3 + b3)


def reference_forward_mixed(imputed_data, hint_matrix, params):
    """JAX reference mimicking the kernel recipe (bf16 matmuls, f32 acc, bf16 out)."""
    w1, b1, w2, b2, w3, b3 = params
    D = imputed_data.shape[1]
    imp = imputed_data.astype(jnp.bfloat16)
    hint = hint_matrix.astype(jnp.bfloat16)
    w1a = w1[:D].astype(jnp.bfloat16)
    w1b = w1[D:].astype(jnp.bfloat16)
    h1 = (jnp.dot(imp, w1a, preferred_element_type=jnp.float32)
          + jnp.dot(hint, w1b, preferred_element_type=jnp.float32) + b1)
    h1 = jnp.maximum(h1, 0.0).astype(jnp.bfloat16)
    h2 = jnp.dot(h1, w2.astype(jnp.bfloat16), preferred_element_type=jnp.float32) + b2
    h2 = jnp.maximum(h2, 0.0).astype(jnp.bfloat16)
    logits = jnp.dot(h2, w3.astype(jnp.bfloat16), preferred_element_type=jnp.float32) + b3
    # Kernel stores the sigmoid as bf16; mirror that rounding here.
    return jax.nn.sigmoid(logits).astype(jnp.bfloat16).astype(jnp.float32)


if __name__ == "__main__":
    input_dim, hidden_dim = 16, 32
    key = jax.random.PRNGKey(0)
    k_imp, k_hint, k_par = jax.random.split(key, 3)
    params = init_params(k_par, input_dim, hidden_dim)
    prepared = prepare_params(params)   # cast/pad weights ONCE, reuse every call

    ok = True
    # (batch, block_b): tiny single-tile case + ragged multi-tile case + default tile.
    for batch, blk in [(8, 512), (200, 64), (200, 2048)]:
        ki, kh = jax.random.split(jax.random.fold_in(k_imp, batch))
        imputed = jax.random.normal(ki, (batch, input_dim), jnp.float32)
        hint = (jax.random.uniform(kh, (batch, input_dim)) > 0.5).astype(jnp.float32)

        out = discriminator_forward(imputed, hint, prepared, block_b=blk)
        out = jax.block_until_ready(out)

        ref_mixed = reference_forward_mixed(imputed, hint, params)
        ref_f32 = reference_forward_f32(imputed, hint, params)

        ok &= out.shape == (batch, input_dim)
        ok &= bool(jnp.allclose(out, ref_mixed, atol=5e-3, rtol=1e-3))   # same recipe
        ok &= bool(jnp.allclose(out, ref_f32, atol=3e-2, rtol=3e-2))     # bf16 vs f32

    if ok:
        print("KERNEL_OK")
    else:
        print("KERNEL_MISMATCH")
</pallas_src>

<mosaic_0001>
module attributes {stable_mosaic.version = 11 : i64} {
  func.func @_discriminator_kernel(%arg0: i32, %arg1: memref<8x16xf32, #tpu.memory_space<vmem>>, %arg2: memref<8x16xf32, #tpu.memory_space<vmem>>, %arg3: memref<16x128xbf16, #tpu.memory_space<vmem>>, %arg4: memref<16x128xbf16, #tpu.memory_space<vmem>>, %arg5: memref<1x128xf32, #tpu.memory_space<vmem>>, %arg6: memref<128x128xbf16, #tpu.memory_space<vmem>>, %arg7: memref<1x128xf32, #tpu.memory_space<vmem>>, %arg8: memref<128x16xbf16, #tpu.memory_space<vmem>>, %arg9: memref<1x16xf32, #tpu.memory_space<vmem>>, %arg10: memref<8x16xbf16, #tpu.memory_space<vmem>>) attributes {dimension_semantics = [#tpu.dimension_semantics<parallel>], iteration_bounds = array<i64: 1>, scalar_prefetch = 0 : i64, scratch_operands = 0 : i64, tpu.core_type = #tpu.core_type<tc>, window_params = [{transform_indices = @transform_0, window_bounds = array<i64: 8, 16>}, {transform_indices = @transform_1, window_bounds = array<i64: 8, 16>}, {pipeline_mode = #tpu.pipeline_mode<synchronous>, transform_indices = @transform_2, window_bounds = array<i64: 16, 128>}, {pipeline_mode = #tpu.pipeline_mode<synchronous>, transform_indices = @transform_3, window_bounds = array<i64: 16, 128>}, {pipeline_mode = #tpu.pipeline_mode<synchronous>, transform_indices = @transform_4, window_bounds = array<i64: 1, 128>}, {pipeline_mode = #tpu.pipeline_mode<synchronous>, transform_indices = @transform_5, window_bounds = array<i64: 128, 128>}, {pipeline_mode = #tpu.pipeline_mode<synchronous>, transform_indices = @transform_6, window_bounds = array<i64: 1, 128>}, {pipeline_mode = #tpu.pipeline_mode<synchronous>, transform_indices = @transform_7, window_bounds = array<i64: 128, 16>}, {pipeline_mode = #tpu.pipeline_mode<synchronous>, transform_indices = @transform_8, window_bounds = array<i64: 1, 16>}, {transform_indices = @transform_9, window_bounds = array<i64: 8, 16>}]} {
    %c0 = arith.constant 0 : index
    %c0_0 = arith.constant 0 : index
    %0 = vector.load %arg1[%c0, %c0_0] : memref<8x16xf32, #tpu.memory_space<vmem>>, vector<8x16xf32>
    %1 = arith.truncf %0 : vector<8x16xf32> to vector<8x16xbf16>
    %c0_1 = arith.constant 0 : index
    %c0_2 = arith.constant 0 : index
    %2 = vector.load %arg2[%c0_1, %c0_2] : memref<8x16xf32, #tpu.memory_space<vmem>>, vector<8x16xf32>
    %3 = arith.truncf %2 : vector<8x16xf32> to vector<8x16xbf16>
    %c0_3 = arith.constant 0 : index
    %c0_4 = arith.constant 0 : index
    %4 = vector.load %arg3[%c0_3, %c0_4] : memref<16x128xbf16, #tpu.memory_space<vmem>>, vector<16x128xbf16>
    %cst = arith.constant dense<0.000000e+00> : vector<8x128xf32>
    %5 = tpu.matmul %1, %4, %cst {dimension_numbers = #tpu.dot_dimension_numbers<[1], [0], [0], [1], [0, 0, 1, 1], [], []>} : vector<8x16xbf16>, vector<16x128xbf16>, vector<8x128xf32> -> vector<8x128xf32>
    %c0_5 = arith.constant 0 : index
    %c0_6 = arith.constant 0 : index
    %6 = vector.load %arg4[%c0_5, %c0_6] : memref<16x128xbf16, #tpu.memory_space<vmem>>, vector<16x128xbf16>
    %cst_7 = arith.constant dense<0.000000e+00> : vector<8x128xf32>
    %7 = tpu.matmul %3, %6, %cst_7 {dimension_numbers = #tpu.dot_dimension_numbers<[1], [0], [0], [1], [0, 0, 1, 1], [], []>} : vector<8x16xbf16>, vector<16x128xbf16>, vector<8x128xf32> -> vector<8x128xf32>
    %8 = arith.addf %5, %7 : vector<8x128xf32>
    %c0_8 = arith.constant 0 : index
    %c0_9 = arith.constant 0 : index
    %9 = vector.load %arg5[%c0_8, %c0_9] : memref<1x128xf32, #tpu.memory_space<vmem>>, vector<1x128xf32>
    %10 = vector.broadcast %9 : vector<1x128xf32> to vector<8x128xf32>
    %11 = arith.addf %8, %10 : vector<8x128xf32>
    %cst_10 = arith.constant 0.000000e+00 : f32
    %12 = vector.broadcast %cst_10 : f32 to vector<8x128xf32>
    %13 = arith.maximumf %11, %12 : vector<8x128xf32>
    %14 = arith.truncf %13 : vector<8x128xf32> to vector<8x128xbf16>
    %c0_11 = arith.constant 0 : index
    %c0_12 = arith.constant 0 : index
    %15 = vector.load %arg6[%c0_11, %c0_12] : memref<128x128xbf16, #tpu.memory_space<vmem>>, vector<128x128xbf16>
    %cst_13 = arith.constant dense<0.000000e+00> : vector<8x128xf32>
    %16 = tpu.matmul %14, %15, %cst_13 {dimension_numbers = #tpu.dot_dimension_numbers<[1], [0], [0], [1], [0, 0, 1, 1], [], []>} : vector<8x128xbf16>, vector<128x128xbf16>, vector<8x128xf32> -> vector<8x128xf32>
    %c0_14 = arith.constant 0 : index
    %c0_15 = arith.constant 0 : index
    %17 = vector.load %arg7[%c0_14, %c0_15] : memref<1x128xf32, #tpu.memory_space<vmem>>, vector<1x128xf32>
    %18 = vector.broadcast %17 : vector<1x128xf32> to vector<8x128xf32>
    %19 = arith.addf %16, %18 : vector<8x128xf32>
    %cst_16 = arith.constant 0.000000e+00 : f32
    %20 = vector.broadcast %cst_16 : f32 to vector<8x128xf32>
    %21 = arith.maximumf %19, %20 : vector<8x128xf32>
    %22 = arith.truncf %21 : vector<8x128xf32> to vector<8x128xbf16>
    %c0_17 = arith.constant 0 : index
    %c0_18 = arith.constant 0 : index
    %23 = vector.load %arg8[%c0_17, %c0_18] : memref<128x16xbf16, #tpu.memory_space<vmem>>, vector<128x16xbf16>
    %cst_19 = arith.constant dense<0.000000e+00> : vector<8x16xf32>
    %24 = tpu.matmul %22, %23, %cst_19 {dimension_numbers = #tpu.dot_dimension_numbers<[1], [0], [0], [1], [0, 0, 1, 1], [], []>} : vector<8x128xbf16>, vector<128x16xbf16>, vector<8x16xf32> -> vector<8x16xf32>
    %c0_20 = arith.constant 0 : index
    %c0_21 = arith.constant 0 : index
    %25 = vector.load %arg9[%c0_20, %c0_21] : memref<1x16xf32, #tpu.memory_space<vmem>>, vector<1x16xf32>
    %26 = vector.broadcast %25 : vector<1x16xf32> to vector<8x16xf32>
    %27 = arith.addf %24, %26 : vector<8x16xf32>
    %28 = arith.negf %27 : vector<8x16xf32>
    %29 = math.exp %28 : vector<8x16xf32>
    %cst_22 = arith.constant 1.000000e+00 : f32
    %30 = vector.broadcast %cst_22 : f32 to vector<8x16xf32>
    %31 = arith.addf %30, %29 : vector<8x16xf32>
    %32 = arith.divf %30, %31 : vector<8x16xf32>
    %33 = arith.truncf %32 : vector<8x16xf32> to vector<8x16xbf16>
    %c0_23 = arith.constant 0 : index
    %c0_24 = arith.constant 0 : index
    %34 = vector.load %arg10[%c0_23, %c0_24] : memref<8x16xbf16, #tpu.memory_space<vmem>>, vector<8x16xbf16>
    tpu.vector_store %arg10[%c0_23, %c0_24], %33 {strides = array<i32>} : memref<8x16xbf16, #tpu.memory_space<vmem>>, vector<8x16xbf16>,
    return
  }
  func.func @transform_0(%arg0: i32) -> (i32, i32) {
    %c0_i32 = arith.constant 0 : i32
    %c0_i32_0 = arith.constant 0 : i32
    return %arg0, %c0_i32 : i32, i32
  }
  func.func @transform_1(%arg0: i32) -> (i32, i32) {
    %c0_i32 = arith.constant 0 : i32
    %c0_i32_0 = arith.constant 0 : i32
    return %arg0, %c0_i32 : i32, i32
  }
  func.func @transform_2(%arg0: i32) -> (i32, i32) {
    %c0_i32 = arith.constant 0 : i32
    %c0_i32_0 = arith.constant 0 : i32
    %c0_i32_1 = arith.constant 0 : i32
    return %c0_i32, %c0_i32_0 : i32, i32
  }
  func.func @transform_3(%arg0: i32) -> (i32, i32) {
    %c0_i32 = arith.constant 0 : i32
    %c0_i32_0 = arith.constant 0 : i32
    %c0_i32_1 = arith.constant 0 : i32
    return %c0_i32, %c0_i32_0 : i32, i32
  }
  func.func @transform_4(%arg0: i32) -> (i32, i32) {
    %c0_i32 = arith.constant 0 : i32
    %c0_i32_0 = arith.constant 0 : i32
    %c0_i32_1 = arith.constant 0 : i32
    return %c0_i32, %c0_i32_0 : i32, i32
  }
  func.func @transform_5(%arg0: i32) -> (i32, i32) {
    %c0_i32 = arith.constant 0 : i32
    %c0_i32_0 = arith.constant 0 : i32
    %c0_i32_1 = arith.constant 0 : i32
    return %c0_i32, %c0_i32_0 : i32, i32
  }
  func.func @transform_6(%arg0: i32) -> (i32, i32) {
    %c0_i32 = arith.constant 0 : i32
    %c0_i32_0 = arith.constant 0 : i32
    %c0_i32_1 = arith.constant 0 : i32
    return %c0_i32, %c0_i32_0 : i32, i32
  }
  func.func @transform_7(%arg0: i32) -> (i32, i32) {
    %c0_i32 = arith.constant 0 : i32
    %c0_i32_0 = arith.constant 0 : i32
    %c0_i32_1 = arith.constant 0 : i32
    return %c0_i32, %c0_i32_0 : i32, i32
  }
  func.func @transform_8(%arg0: i32) -> (i32, i32) {
    %c0_i32 = arith.constant 0 : i32
    %c0_i32_0 = arith.constant 0 : i32
    %c0_i32_1 = arith.constant 0 : i32
    return %c0_i32, %c0_i32_0 : i32, i32
  }
  func.func @transform_9(%arg0: i32) -> (i32, i32) {
    %c0_i32 = arith.constant 0 : i32
    %c0_i32_0 = arith.constant 0 : i32
    return %arg0, %c0_i32 : i32, i32
  }
}

</mosaic_0001>

<llo_original>
// kernel: tpu_custom_call.1
$region0: #{tpu_custom_call.1}
  #allocation0 [shape = 'u32[]', space=smem, size = 0x4, offset = 0x4, fixed_abs, tag = 'smem constant byte address 0x4 - core index']
  #allocation1 [shape = 'u32[72,128]{1,0:T(1,128)}', space=vmem, size = 0x9000, scoped, tag = 'internal scratch']
  %s0 = inlined_call_operand.vmem [shape: f32[8,16], index: 0, kind: input, shape index: {}]
  %s1 = inlined_call_operand.hbm [shape: f32[8,16], index: 1, kind: input, shape index: {}]
  %s2 = inlined_call_operand.hbm [shape: bf16[16,128], index: 2, kind: input, shape index: {}]
  %s3 = inlined_call_operand.hbm [shape: bf16[16,128], index: 3, kind: input, shape index: {}]
  %s4 = inlined_call_operand.vmem [shape: f32[1,128], index: 4, kind: input, shape index: {}]
  %s5 = inlined_call_operand.vmem [shape: bf16[128,128], index: 5, kind: input, shape index: {}]
  %s6 = inlined_call_operand.vmem [shape: f32[1,128], index: 6, kind: input, shape index: {}]
  %s7 = inlined_call_operand.vmem [shape: bf16[128,16], index: 7, kind: input, shape index: {}]
  %s8 = inlined_call_operand.vmem [shape: f32[1,16], index: 8, kind: input, shape index: {}]
  %s9 = inlined_call_operand.hbm [shape: bf16[8,16], index: 9, kind: output, shape index: {}]
  %s10 = sld [smem:[#allocation0]]
  $region58: #{tpu_custom_call.1} parent=0
    _
  %s12 = ssub.s32 1, %s10
  %s13 = scalar_select 0, %s12, %s10
  $region1: #{tpu_custom_call.1} parent=0
    #allocation2 [shape = 'u8[4096]{0}', space=vmem, size = 0x1000, scoped, tag = 'input window, operand 1, single buffered']
    #allocation3 [shape = 's32[1]{0}', space=sflag, size = 0x4, scoped, tag = 'scoped memory for tpu_custom_call.1']
    #allocation4 [shape = 's32[1]{0}', space=sflag, size = 0x4, scoped, tag = 'scoped memory for tpu_custom_call.1']
    #allocation5 [shape = 'u8[4096]{0}', space=vmem, size = 0x1000, scoped, tag = 'input window, operand 2, single buffered']
    #allocation6 [shape = 's32[1]{0}', space=sflag, size = 0x4, scoped, tag = 'scoped memory for tpu_custom_call.1']
    #allocation7 [shape = 'u8[4096]{0}', space=vmem, size = 0x1000, scoped, tag = 'input window, operand 3, single buffered']
    #allocation8 [shape = 'u8[2048]{0}', space=vmem, size = 0x800, scoped, tag = 'output window, operand 0, single buffered']
    %14 = vsyncpa [#allocation3], 0
    %15 = vsyncpa [#allocation6], 0
    %16 = vsyncpa [#allocation4], 0
    // Predicated region
    $region2: #{tpu_custom_call.1} parent=1 // pred_check
      _
    $region3: #{tpu_custom_call.1} parent=1 // pred_check_branch
      %18 = sbr.rel (0) target = $region5
    $region4: #{tpu_custom_call.1} parent=1 // pred_region
      _
    $region5: #{tpu_custom_call.1} parent=1 // pred_fallthru
      _
    // Predicated region
    $region6: #{tpu_custom_call.1} parent=1 // pred_check
      _
    $region7: #{tpu_custom_call.1} parent=1 // pred_check_branch
      %20 = sbr.rel (0) target = $region9
    $region8: #{tpu_custom_call.1} parent=1 // pred_region
      %22 = vsyncadd [#allocation3], 0
      %s24 = sshll.u32 %s1, 4
      %s25 = int_to_ptr.hbm [resolvable:$true] %s24
      %s26 = sshll.u32 [#allocation2], 4
      %s27 = int_to_ptr.vmem [resolvable:$true] %s26
      %29 = dma.hbm_to_vmem [thread:$0]  %s25, 128, %s27, [#allocation3]
    $region9: #{tpu_custom_call.1} parent=1 // pred_fallthru
      _
    // Predicated region
    $region10: #{tpu_custom_call.1} parent=1 // pred_check
      _
    $region11: #{tpu_custom_call.1} parent=1 // pred_check_branch
      %31 = sbr.rel (0) target = $region13
    $region12: #{tpu_custom_call.1} parent=1 // pred_region
      %33 = vsyncadd [#allocation6], 0
      %s34 = sshll.u32 %s2, 4
      %s35 = int_to_ptr.hbm [resolvable:$true] %s34
      %s36 = sshll.u32 [#allocation5], 4
      %s37 = int_to_ptr.vmem [resolvable:$true] %s36
      %42 = dma.hbm_to_vmem [thread:$0]  %s35, 128, %s37, [#allocation6], 64, 64, 4
    $region13: #{tpu_custom_call.1} parent=1 // pred_fallthru
      _
    // Predicated region
    $region14: #{tpu_custom_call.1} parent=1 // pred_check
      _
    $region15: #{tpu_custom_call.1} parent=1 // pred_check_branch
      %44 = sbr.rel (0) target = $region17
    $region16: #{tpu_custom_call.1} parent=1 // pred_region
      %46 = vsyncadd [#allocation6], 0
      %s47 = sshll.u32 %s3, 4
      %s48 = int_to_ptr.hbm [resolvable:$true] %s47
      %s49 = sshll.u32 [#allocation7], 4
      %s50 = int_to_ptr.vmem [resolvable:$true] %s49
      %55 = dma.hbm_to_vmem [thread:$0]  %s48, 128, %s50, [#allocation6], 64, 64, 4
    $region17: #{tpu_custom_call.1} parent=1 // pred_fallthru
      _
    // Predicated region
    $region18: #{tpu_custom_call.1} parent=1 // pred_check
      _
    $region19: #{tpu_custom_call.1} parent=1 // pred_check_branch
      %57 = sbr.rel (0) target = $region21
    $region20: #{tpu_custom_call.1} parent=1 // pred_region
      _
    $region21: #{tpu_custom_call.1} parent=1 // pred_fallthru
      _
    // Predicated region
    $region22: #{tpu_custom_call.1} parent=1 // pred_check
      _
    $region23: #{tpu_custom_call.1} parent=1 // pred_check_branch
      %59 = sbr.rel (0) target = $region25
    $region24: #{tpu_custom_call.1} parent=1 // pred_region
      _
    $region25: #{tpu_custom_call.1} parent=1 // pred_fallthru
      _
    // Predicated region
    $region26: #{tpu_custom_call.1} parent=1 // pred_check
      _
    $region27: #{tpu_custom_call.1} parent=1 // pred_check_branch
      %61 = sbr.rel (0) target = $region29
    $region28: #{tpu_custom_call.1} parent=1 // pred_region
      _
    $region29: #{tpu_custom_call.1} parent=1 // pred_fallthru
      _
    // Predicated region
    $region30: #{tpu_custom_call.1} parent=1 // pred_check
      _
    $region31: #{tpu_custom_call.1} parent=1 // pred_check_branch
      %63 = sbr.rel (0) target = $region33
    $region32: #{tpu_custom_call.1} parent=1 // pred_region
      _
    $region33: #{tpu_custom_call.1} parent=1 // pred_fallthru
      _
    // Predicated region
    $region34: #{tpu_custom_call.1} parent=1 // pred_check
      _
    $region35: #{tpu_custom_call.1} parent=1 // pred_check_branch
      %65 = sbr.rel (0) target = $region37
    $region36: #{tpu_custom_call.1} parent=1 // pred_region
      _
    $region37: #{tpu_custom_call.1} parent=1 // pred_fallthru
      _
    // Predicated region
    $region38: #{tpu_custom_call.1} parent=1 // pred_check
      _
    $region39: #{tpu_custom_call.1} parent=1 // pred_check_branch
      %67 = sbr.rel (0) target = $region41
    $region40: #{tpu_custom_call.1} parent=1 // pred_region
      %69 = dma.done [#allocation3], 128
    $region41: #{tpu_custom_call.1} parent=1 // pred_fallthru
      _
    // Predicated region
    $region42: #{tpu_custom_call.1} parent=1 // pred_check
      _
    $region43: #{tpu_custom_call.1} parent=1 // pred_check_branch
      %71 = sbr.rel (0) target = $region45
    $region44: #{tpu_custom_call.1} parent=1 // pred_region
      %73 = dma.done [#allocation6], 128
    $region45: #{tpu_custom_call.1} parent=1 // pred_fallthru
      _
    // Predicated region
    $region46: #{tpu_custom_call.1} parent=1 // pred_check
      _
    $region47: #{tpu_custom_call.1} parent=1 // pred_check_branch
      %75 = sbr.rel (0) target = $region49
    $region48: #{tpu_custom_call.1} parent=1 // pred_region
      %77 = dma.done [#allocation6], 128
    $region49: #{tpu_custom_call.1} parent=1 // pred_fallthru
      _
    %v79 = vld [vmem:[%s0] sm:$0xff]
    %v80 = vpack.c.bf16 %v79, %v79
    %v81 = vld [vmem:[#allocation2] sm:$0xff]
    %v82 = vpack.c.bf16 %v81, %v81
    %v83 = vld [vmem:[#allocation5] sm:$0xf]
    %v84 = vld [vmem:[#allocation5 + $0x4] sm:$0xf]
    %v85 = vld [vmem:[#allocation7] sm:$0xf]
    %v86 = vld [vmem:[#allocation7 + $0x4] sm:$0xf]
    %v89 = vunpack.c.l.b16 %v85
    %v90 = vunpack.c.l.b16 %v86
    %v91 = vpack.c.b16 %v90, %v89
    %vm93 = vcmask 130048
    %v95 = vsel %vm93, %v82, 0
    %97 = vmatpush.bf16.msra.mxu0 0
    %98 = vmatpush.bf16.msra.mxu0 0
    %99 = vmatpush.bf16.msra.mxu0 0
    %100 = vmatpush.bf16.msra.mxu0 0
    %101 = vmatpush.bf16.msra.mxu0 0
    %102 = vmatpush.bf16.msra.mxu0 0
    %103 = vmatpush.bf16.msra.mxu0 0
    %104 = vmatpush.bf16.msra.mxu0 %v91
    %105 = vmatmul.bf16.gmra.mxu0 %v95
    %v106 = vpop.f32.mrf.mxu0
    %v107 = vadd.f32 0.0, %v106
    %v108 = vpop.f32.mrf.mxu0
    %109 = vdwg.mxu0
    %v112 = vunpack.c.l.b16 %v83
    %v113 = vunpack.c.l.b16 %v84
    %v114 = vpack.c.b16 %v113, %v112
    %v117 = vsel %vm93, %v80, 0
    %119 = vmatpush.bf16.msra.mxu0 0
    %120 = vmatpush.bf16.msra.mxu0 0
    %121 = vmatpush.bf16.msra.mxu0 0
    %122 = vmatpush.bf16.msra.mxu0 0
    %123 = vmatpush.bf16.msra.mxu0 0
    %124 = vmatpush.bf16.msra.mxu0 0
    %125 = vmatpush.bf16.msra.mxu0 0
    %126 = vmatpush.bf16.msra.mxu0 %v114
    %127 = vmatmul.bf16.gmra.mxu0 %v117
    %v128 = vpop.f32.mrf.mxu0
    %v129 = vadd.f32 %v107, %v128
    %v130 = vpop.f32.mrf.mxu0
    %131 = vdwg.mxu0
    %v132 = vld [vmem:[%s4] sm:$0x1]
    %v134 = vperm.slane %v132, 0
    %v136 = vadd.f32 %v129, %v134
    %v137 = vmax.f32 %v136, 0.0
    %v138 = vpack.c.bf16 %v137, %v137
    %v139 = vld [vmem:[%s5] sm:$0xf]
    %v140 = vld [vmem:[%s5 + $0x4] sm:$0xf]
    %v141 = vld [vmem:[%s5 + $0x8] sm:$0xf]
    %v142 = vld [vmem:[%s5 + $0xc] sm:$0xf]
    %v143 = vld [vmem:[%s5 + $0x10] sm:$0xf]
    %v144 = vld [vmem:[%s5 + $0x14] sm:$0xf]
    %v145 = vld [vmem:[%s5 + $0x18] sm:$0xf]
    %v146 = vld [vmem:[%s5 + $0x1c] sm:$0xf]
    %v147 = vld [vmem:[%s5 + $0x20] sm:$0xf]
    %v148 = vld [vmem:[%s5 + $0x24] sm:$0xf]
    %v149 = vld [vmem:[%s5 + $0x28] sm:$0xf]
    %v150 = vld [vmem:[%s5 + $0x2c] sm:$0xf]
    %v151 = vld [vmem:[%s5 + $0x30] sm:$0xf]
    %v152 = vld [vmem:[%s5 + $0x34] sm:$0xf]
    %v153 = vld [vmem:[%s5 + $0x38] sm:$0xf]
    %v154 = vld [vmem:[%s5 + $0x3c] sm:$0xf]
    %v155 = vld [vmem:[%s6] sm:$0x1]
    %v157 = vperm.slane %v155, 0
    %v175 = vunpack.c.l.b16 %v139
    %v176 = vunpack.c.l.b16 %v140
    %v177 = vunpack.c.l.b16 %v141
    %v178 = vunpack.c.l.b16 %v142
    %v179 = vunpack.c.l.b16 %v143
    %v180 = vunpack.c.l.b16 %v144
    %v181 = vunpack.c.l.b16 %v145
    %v182 = vunpack.c.l.b16 %v146
    %v183 = vunpack.c.l.b16 %v147
    %v184 = vunpack.c.l.b16 %v148
    %v185 = vunpack.c.l.b16 %v149
    %v186 = vunpack.c.l.b16 %v150
    %v187 = vunpack.c.l.b16 %v151
    %v188 = vunpack.c.l.b16 %v152
    %v189 = vunpack.c.l.b16 %v153
    %v190 = vunpack.c.l.b16 %v154
    %v191 = vpack.c.b16 %v176, %v175
    %v192 = vpack.c.b16 %v178, %v177
    %v193 = vpack.c.b16 %v180, %v179
    %v194 = vpack.c.b16 %v182, %v181
    %v195 = vpack.c.b16 %v184, %v183
    %v196 = vpack.c.b16 %v186, %v185
    %v197 = vpack.c.b16 %v188, %v187
    %v198 = vpack.c.b16 %v190, %v189
    %207 = vmatpush.bf16.msra.mxu0 %v198
    %208 = vmatpush.bf16.msra.mxu0 %v197
    %209 = vmatpush.bf16.msra.mxu0 %v196
    %210 = vmatpush.bf16.msra.mxu0 %v195
    %211 = vmatpush.bf16.msra.mxu0 %v194
    %212 = vmatpush.bf16.msra.mxu0 %v193
    %213 = vmatpush.bf16.msra.mxu0 %v192
    %214 = vmatpush.bf16.msra.mxu0 %v191
    %215 = vmatmul.bf16.gmra.mxu0 %v138
    %v216 = vpop.f32.mrf.mxu0
    %v217 = vadd.f32 %v157, %v216
    %v218 = vpop.f32.mrf.mxu0
    %219 = vdwg.mxu0
    %v220 = vmax.f32 %v217, 0.0
    %v221 = vpack.c.bf16 %v220, %v220
    %v222 = vld [vmem:[%s7] sm:$0xf]
    %v223 = vld [vmem:[%s7 + $0x4] sm:$0xf]
    %v224 = vld [vmem:[%s7 + $0x8] sm:$0xf]
    %v225 = vld [vmem:[%s7 + $0xc] sm:$0xf]
    %v226 = vld [vmem:[%s7 + $0x10] sm:$0xf]
    %v227 = vld [vmem:[%s7 + $0x14] sm:$0xf]
    %v228 = vld [vmem:[%s7 + $0x18] sm:$0xf]
    %v229 = vld [vmem:[%s7 + $0x1c] sm:$0xf]
    %v230 = vld [vmem:[%s7 + $0x20] sm:$0xf]
    %v231 = vld [vmem:[%s7 + $0x24] sm:$0xf]
    %v232 = vld [vmem:[%s7 + $0x28] sm:$0xf]
    %v233 = vld [vmem:[%s7 + $0x2c] sm:$0xf]
    %v234 = vld [vmem:[%s7 + $0x30] sm:$0xf]
    %v235 = vld [vmem:[%s7 + $0x34] sm:$0xf]
    %v236 = vld [vmem:[%s7 + $0x38] sm:$0xf]
    %v237 = vld [vmem:[%s7 + $0x3c] sm:$0xf]
    %v238 = vld [vmem:[%s8] sm:$0x1]
    %v240 = vperm.slane %v238, 0
    %v258 = vunpack.c.l.b16 %v222
    %v259 = vunpack.c.l.b16 %v223
    %v260 = vunpack.c.l.b16 %v224
    %v261 = vunpack.c.l.b16 %v225
    %v262 = vunpack.c.l.b16 %v226
    %v263 = vunpack.c.l.b16 %v227
    %v264 = vunpack.c.l.b16 %v228
    %v265 = vunpack.c.l.b16 %v229
    %v266 = vunpack.c.l.b16 %v230
    %v267 = vunpack.c.l.b16 %v231
    %v268 = vunpack.c.l.b16 %v232
    %v269 = vunpack.c.l.b16 %v233
    %v270 = vunpack.c.l.b16 %v234
    %v271 = vunpack.c.l.b16 %v235
    %v272 = vunpack.c.l.b16 %v236
    %v273 = vunpack.c.l.b16 %v237
    %v274 = vpack.c.b16 %v259, %v258
    %v275 = vpack.c.b16 %v261, %v260
    %v276 = vpack.c.b16 %v263, %v262
    %v277 = vpack.c.b16 %v265, %v264
    %v278 = vpack.c.b16 %v267, %v266
    %v279 = vpack.c.b16 %v269, %v268
    %v280 = vpack.c.b16 %v271, %v270
    %v281 = vpack.c.b16 %v273, %v272
    %290 = vmatpush.bf16.msra.mxu0 %v281
    %291 = vmatpush.bf16.msra.mxu0 %v280
    %292 = vmatpush.bf16.msra.mxu0 %v279
    %293 = vmatpush.bf16.msra.mxu0 %v278
    %294 = vmatpush.bf16.msra.mxu0 %v277
    %295 = vmatpush.bf16.msra.mxu0 %v276
    %296 = vmatpush.bf16.msra.mxu0 %v275
    %297 = vmatpush.bf16.msra.mxu0 %v274
    %298 = vmatmul.bf16.gmra.mxu0 %v221
    %v299 = vpop.f32.mrf.mxu0
    %v300 = vadd.f32 %v240, %v299
    %v301 = vpop.f32.mrf.mxu0
    %302 = vdwg.mxu0
    %v303 = vxor.u32 %v300, 2147483648
    %v304 = vmul.f32 %v303, 1.442695
    %v305 = vpow.pop %v304
    %v306 = vadd.f32 %v305, 1.0
    %v307 = vrcp.pop %v306
    %v308 = vmul.f32 %v306, %v307
    %v309 = vsub.f32 1.0, %v308
    %v310 = vmul.f32 %v307, %v309
    %v311 = vadd.f32 %v307, %v310
    %vm312 = vweird.f32 %v306
    %vm313 = vweird.f32 %v307
    %vm314 = vmor %vm312, %vm313
    %v315 = vsel %vm314, %v307, %v311
    %v316 = vand.u32 2147483647, %v306
    %vm317 = vcmp.eq.f32.partialorder %v316, 8.507059e+37
    %v318 = vand.u32 %v306, 2147483648
    %v319 = vor.u32 1.1754944e-38, %v318
    %v320 = vsel %vm317, %v319, %v315
    %v321 = vmul.f32 1.0, %v320
    %v322 = vpack.c.bf16 %v321, %v321
    %vm323 = vcmask 125952
    %324 = vst.msk [vmem:[#allocation8] sm:$0xf] %vm323, %v322
    // Predicated region
    $region50: #{tpu_custom_call.1} parent=1 // pred_check
      _
    $region51: #{tpu_custom_call.1} parent=1 // pred_check_branch
      %326 = sbr.rel (0) target = $region53
    $region52: #{tpu_custom_call.1} parent=1 // pred_region
      %328 = vsyncadd [#allocation4], 0
      %s330 = sshll.u32 [#allocation8], 4
      %s331 = int_to_ptr.vmem [resolvable:$true] %s330
      %s332 = sshll.u32 %s9, 4
      %s333 = int_to_ptr.hbm [resolvable:$true] %s332
      %335 = dma.vmem_to_hbm [thread:$0]  %s331, 64, %s333, [#allocation4]
    $region53: #{tpu_custom_call.1} parent=1 // pred_fallthru
      _
    // Predicated region
    $region54: #{tpu_custom_call.1} parent=1 // pred_check
      _
    $region55: #{tpu_custom_call.1} parent=1 // pred_check_branch
      %337 = sbr.rel (0) target = $region57
    $region56: #{tpu_custom_call.1} parent=1 // pred_region
      %339 = dma.done [#allocation4], 64
    $region57: #{tpu_custom_call.1} parent=1 // pred_fallthru
      _
    %340 = vsyncpa [#allocation3], 1
    %341 = vsyncpa [#allocation6], 1
    %342 = vsyncpa [#allocation4], 1

</llo_original>
